<compile_context>
chip_gen: v6e
topology: v6e:2x2x1
jax: 0.10.0
libtpu: 0.0.40
codegen_flags: <defaults>
</compile_context>

<pallas_src>
import math

import jax
import jax.numpy as jnp
from jax.experimental import pallas as pl
from jax.experimental.pallas import tpu as pltpu


def _pe_add_kernel(x_ref, pe_ref, o_ref):
    # x_ref : (ts, tb, E)  slab of the ORIGINAL (seq, batch, emb) input
    # pe_ref: (tb, E)      positional-encoding rows for this batch tile
    # o_ref : (tb, ts, E)  output slab already in (batch, seq, emb) order
    #
    # The permute is realised by the BlockSpec index maps plus per-batch-row
    # sublane-strided reads below — no extra HBM pass and no transpose op.
    # TODO(synk): nn.Dropout is identity in inference; training-mode dropout
    # would need pltpu.prng_seed / pltpu.prng_random_bits masking here.
    tb, ts, E = o_ref.shape
    itemsize = jnp.dtype(o_ref.dtype).itemsize
    e_pad = ((E + 127) // 128) * 128
    # Chunk the seq dim so each loaded value stays ~<=128 KiB of padded vregs.
    cs = max(8, ((128 * 1024) // (e_pad * itemsize)) // 8 * 8)
    cs = min(ts, cs)

    for b in range(tb):                       # static unroll, tb <= 32
        pe_row = pe_ref[b:b + 1, :]           # (1, E)
        start = 0
        while start < ts:                     # static chunking over seq rows
            rows = min(cs, ts - start)
            x_slab = x_ref[start:start + rows, b, :]        # (rows, E) strided read
            o_ref[b, start:start + rows, :] = (x_slab + pe_row).astype(o_ref.dtype)
            start += rows


def make_positional_encoding(max_len, emb_size, dtype=jnp.float32):
    """pe[p, e] matching the torch buffer pe[:, 0, :] (emb_size must be even)."""
    position = jnp.arange(max_len, dtype=jnp.float32)[:, None]             # (L, 1)
    div_term = jnp.exp(jnp.arange(0, emb_size, 2, dtype=jnp.float32)
                       * (-math.log(10000.0) / emb_size))                  # (E/2,)
    angles = position * div_term                                           # (L, E/2)
    pe = jnp.zeros((max_len, emb_size), jnp.float32)
    pe = pe.at[:, 0::2].set(jnp.sin(angles))
    pe = pe.at[:, 1::2].set(jnp.cos(angles))
    return pe.astype(dtype)


def _round_up(x, m):
    return ((x + m - 1) // m) * m


def _cdiv(a, b):
    return -(-a // b)


def _vmem_capacity_bytes():
    try:
        return int(pltpu.get_tpu_info().vmem_capacity_bytes)
    except Exception:
        return 64 << 20          # conservative (v7x-sized) default


def _plan_tiles(S, B, E, itemsize, vmem_cap):
    """Pick (tb, ts, n_b, n_s): dtype-aware granules, ~5-8 MiB per grid step."""
    granule = max(8, 32 // itemsize)          # 8 f32, 16 bf16, 32 int8/fp8
    tb = B if B <= 32 else granule            # small batch: full extent (contiguous DMA)
    e_pad = _round_up(E, 128)
    # Padded VMEM bytes per seq row (x tile + out tile, single buffer).
    row_bytes = (_round_up(tb, granule) + tb) * e_pad * itemsize
    # v7x (64 MiB VMEM): ~5 MiB per step; v5e/v6e (128 MiB): ~8 MiB per step.
    tile_budget = (5 << 20) if vmem_cap <= (64 << 20) else (8 << 20)
    max_rows = max(granule, (tile_budget // row_bytes) // granule * granule)
    ts = S if S <= max_rows else max_rows
    n_b, n_s = _cdiv(B, tb), _cdiv(S, ts)
    # v7x megacore: keep >=2 parallel grid steps when there is work to split.
    if n_b * n_s == 1 and S > granule:
        ts = max(granule, _round_up(_cdiv(S, 2), granule))
        n_s = _cdiv(S, ts)
    return tb, ts, n_b, n_s


@jax.jit
def positional_encoding_forward(x, pe):
    """x: (seq_len, batch, emb). pe: (max_len, emb). Returns (batch, seq_len, emb)."""
    S, B, E = x.shape
    if B > pe.shape[0]:
        raise ValueError("batch size exceeds max_len of the positional encoding")

    itemsize = jnp.dtype(x.dtype).itemsize
    vmem_cap = _vmem_capacity_bytes()
    tb, ts, n_b, n_s = _plan_tiles(S, B, E, itemsize, vmem_cap)

    pe_b = pe[:B].astype(x.dtype)             # tiny; same dtype as x (no VPU upcast)

    # Cap well below physical VMEM (48 MiB on 64 MiB parts, 64 MiB otherwise).
    vmem_limit = (48 << 20) if vmem_cap <= (64 << 20) else (64 << 20)

    cost = pl.CostEstimate(
        flops=B * S * E,
        transcendentals=0,
        bytes_accessed=(2 * B * S * E + B * E) * itemsize,
    )

    return pl.pallas_call(
        _pe_add_kernel,
        out_shape=jax.ShapeDtypeStruct((B, S, E), x.dtype),
        grid=(n_b, n_s),                      # seq innermost -> pe DMA only when b changes
        in_specs=[
            pl.BlockSpec((ts, tb, E), lambda b, s: (s, b, 0)),   # original-layout x slab
            pl.BlockSpec((tb, E), lambda b, s: (b, 0)),          # pe rows for this batch tile
        ],
        out_specs=pl.BlockSpec((tb, ts, E), lambda b, s: (b, s, 0)),
        compiler_params=pltpu.CompilerParams(
            dimension_semantics=("parallel", "parallel"),
            vmem_limit_bytes=vmem_limit,
        ),
        cost_estimate=cost,
    )(x, pe_b)


def _reference(x, pe):
    """Pure-JAX reference, faithful to the torch forward (permute-then-add)."""
    B = x.shape[1]
    return jnp.transpose(x, (1, 0, 2)) + pe[:B][:, None, :]


if __name__ == "__main__":
    key = jax.random.PRNGKey(0)

    seq_len, batch, emb_size, max_len = 8, 2, 32, 16
    dropout_rate = 0.1  # nn.Dropout -> identity in inference mode

    x = jax.random.normal(key, (seq_len, batch, emb_size), jnp.float32)
    pe = make_positional_encoding(max_len, emb_size)

    out = positional_encoding_forward(x, pe)
    out = jax.block_until_ready(out)

    ref = _reference(x, pe)
    assert out.shape == (batch, seq_len, emb_size), out.shape
    assert jnp.allclose(out, ref, atol=1e-6, rtol=1e-6), float(jnp.max(jnp.abs(out - ref)))

    print("KERNEL_OK")
</pallas_src>

<mosaic_0001>
module attributes {stable_mosaic.version = 11 : i64} {
  func.func @_pe_add_kernel(%arg0: i32, %arg1: i32, %arg2: memref<8x2x32xf32, #tpu.memory_space<vmem>>, %arg3: memref<2x32xf32, #tpu.memory_space<vmem>>, %arg4: memref<2x8x32xf32, #tpu.memory_space<vmem>>) attributes {dimension_semantics = [#tpu.dimension_semantics<parallel>, #tpu.dimension_semantics<parallel>], iteration_bounds = array<i64: 1, 1>, scalar_prefetch = 0 : i64, scratch_operands = 0 : i64, tpu.core_type = #tpu.core_type<tc>, window_params = [{transform_indices = @transform_0, window_bounds = array<i64: 8, 2, 32>}, {transform_indices = @transform_1, window_bounds = array<i64: 2, 32>}, {transform_indices = @transform_2, window_bounds = array<i64: 2, 8, 32>}]} {
    %c0 = arith.constant 0 : index
    %c0_0 = arith.constant 0 : index
    %0 = vector.load %arg3[%c0, %c0_0] : memref<2x32xf32, #tpu.memory_space<vmem>>, vector<1x32xf32>
    %c0_1 = arith.constant 0 : index
    %c0_2 = arith.constant 0 : index
    %c0_3 = arith.constant 0 : index
    %1 = vector.load %arg2[%c0_1, %c0_2, %c0_3] : memref<8x2x32xf32, #tpu.memory_space<vmem>>, vector<8x1x32xf32>
    %2 = vector.shape_cast %1 : vector<8x1x32xf32> to vector<8x32xf32>
    %3 = vector.broadcast %0 : vector<1x32xf32> to vector<8x32xf32>
    %4 = arith.addf %2, %3 : vector<8x32xf32>
    %c0_4 = arith.constant 0 : index
    %c0_5 = arith.constant 0 : index
    %c0_6 = arith.constant 0 : index
    %5 = vector.load %arg4[%c0_4, %c0_5, %c0_6] : memref<2x8x32xf32, #tpu.memory_space<vmem>>, vector<1x8x32xf32>
    %6 = vector.shape_cast %5 : vector<1x8x32xf32> to vector<8x32xf32>
    %7 = vector.shape_cast %4 : vector<8x32xf32> to vector<1x8x32xf32>
    tpu.vector_store %arg4[%c0_4, %c0_5, %c0_6], %7 {strides = array<i32>} : memref<2x8x32xf32, #tpu.memory_space<vmem>>, vector<1x8x32xf32>,
    %c1 = arith.constant 1 : index
    %c0_7 = arith.constant 0 : index
    %8 = vector.load %arg3[%c1, %c0_7] : memref<2x32xf32, #tpu.memory_space<vmem>>, vector<1x32xf32>
    %c0_8 = arith.constant 0 : index
    %c1_9 = arith.constant 1 : index
    %c0_10 = arith.constant 0 : index
    %9 = vector.load %arg2[%c0_8, %c1_9, %c0_10] : memref<8x2x32xf32, #tpu.memory_space<vmem>>, vector<8x1x32xf32>
    %10 = vector.shape_cast %9 : vector<8x1x32xf32> to vector<8x32xf32>
    %11 = vector.broadcast %8 : vector<1x32xf32> to vector<8x32xf32>
    %12 = arith.addf %10, %11 : vector<8x32xf32>
    %c1_11 = arith.constant 1 : index
    %c0_12 = arith.constant 0 : index
    %c0_13 = arith.constant 0 : index
    %13 = vector.load %arg4[%c1_11, %c0_12, %c0_13] : memref<2x8x32xf32, #tpu.memory_space<vmem>>, vector<1x8x32xf32>
    %14 = vector.shape_cast %13 : vector<1x8x32xf32> to vector<8x32xf32>
    %15 = vector.shape_cast %12 : vector<8x32xf32> to vector<1x8x32xf32>
    tpu.vector_store %arg4[%c1_11, %c0_12, %c0_13], %15 {strides = array<i32>} : memref<2x8x32xf32, #tpu.memory_space<vmem>>, vector<1x8x32xf32>,
    return
  }
  func.func @transform_0(%arg0: i32, %arg1: i32) -> (i32, i32, i32) {
    %c0_i32 = arith.constant 0 : i32
    %c0_i32_0 = arith.constant 0 : i32
    return %arg1, %arg0, %c0_i32 : i32, i32, i32
  }
  func.func @transform_1(%arg0: i32, %arg1: i32) -> (i32, i32) {
    %c0_i32 = arith.constant 0 : i32
    %c0_i32_0 = arith.constant 0 : i32
    return %arg0, %c0_i32 : i32, i32
  }
  func.func @transform_2(%arg0: i32, %arg1: i32) -> (i32, i32, i32) {
    %c0_i32 = arith.constant 0 : i32
    %c0_i32_0 = arith.constant 0 : i32
    return %arg0, %arg1, %c0_i32 : i32, i32, i32
  }
}

</mosaic_0001>

<llo_original>
// kernel: positional_encoding_forward.1
$region0: #{positional_encoding_forward.1}
  #allocation0 [shape = 'u32[]', space=smem, size = 0x4, offset = 0x4, fixed_abs, tag = 'smem constant byte address 0x4 - core index']
  #allocation1 [shape = 'u32[144,128]{1,0:T(1,128)}', space=vmem, size = 0x12000, scoped, tag = 'internal scratch']
  %s0 = inlined_call_operand.hbm [shape: f32[8,2,32], index: 0, kind: input, shape index: {}]
  %s1 = inlined_call_operand.vmem [shape: f32[2,32], index: 1, kind: input, shape index: {}]
  %s2 = inlined_call_operand.hbm [shape: f32[2,8,32], index: 2, kind: output, shape index: {}]
  %s3 = sld [smem:[#allocation0]]
  $region22: #{positional_encoding_forward.1} parent=0
    _
  %s5 = ssub.s32 1, %s3
  %s6 = scalar_select 0, %s5, %s3
  $region1: #{positional_encoding_forward.1} parent=0
    #allocation2 [shape = 'u8[8192]{0}', space=vmem, size = 0x2000, scoped, tag = 'input window, operand 0, single buffered']
    #allocation3 [shape = 's32[1]{0}', space=sflag, size = 0x4, scoped, tag = 'scoped memory for positional_encoding_forward.1']
    #allocation4 [shape = 's32[1]{0}', space=sflag, size = 0x4, scoped, tag = 'scoped memory for positional_encoding_forward.1']
    #allocation5 [shape = 'u8[8192]{0}', space=vmem, size = 0x2000, scoped, tag = 'output window, operand 0, single buffered']
    %7 = vsyncpa [#allocation3], 0
    %8 = vsyncpa [#allocation4], 0
    // Predicated region
    $region2: #{positional_encoding_forward.1} parent=1 // pred_check
      _
    $region3: #{positional_encoding_forward.1} parent=1 // pred_check_branch
      %10 = sbr.rel (0) target = $region5
    $region4: #{positional_encoding_forward.1} parent=1 // pred_region
      %s12 = ssub.s32 256, 256
      %13 = vsyncadd [#allocation3], %s12
      %s14 = sshll.u32 [#allocation2], 4
      %s15 = int_to_ptr.vmem [resolvable:$true] %s14
      %20 = dma.hbm_to_vmem [thread:$0]  %s0, 256, %s15, [#allocation3], 32, 32, 2
    $region5: #{positional_encoding_forward.1} parent=1 // pred_fallthru
      _
    // Predicated region
    $region6: #{positional_encoding_forward.1} parent=1 // pred_check
      _
    $region7: #{positional_encoding_forward.1} parent=1 // pred_check_branch
      %22 = sbr.rel (0) target = $region9
    $region8: #{positional_encoding_forward.1} parent=1 // pred_region
      _
    $region9: #{positional_encoding_forward.1} parent=1 // pred_fallthru
      _
    // Predicated region
    $region10: #{positional_encoding_forward.1} parent=1 // pred_check
      _
    $region11: #{positional_encoding_forward.1} parent=1 // pred_check_branch
      %24 = sbr.rel (0) target = $region13
    $region12: #{positional_encoding_forward.1} parent=1 // pred_region
      %25 = dma.done [#allocation3], 256
    $region13: #{positional_encoding_forward.1} parent=1 // pred_fallthru
      _
    %v26 = vld [vmem:[%s1] sm:$0x1]
    %v27 = vld [vmem:[#allocation2] sm:$0x1]
    %v28 = vld [vmem:[#allocation2 + $0x2] sm:$0x1]
    %v29 = vld [vmem:[#allocation2 + $0x4] sm:$0x1]
    %v30 = vld [vmem:[#allocation2 + $0x6] sm:$0x1]
    %v31 = vld [vmem:[#allocation2 + $0x8] sm:$0x1]
    %v32 = vld [vmem:[#allocation2 + $0xa] sm:$0x1]
    %v33 = vld [vmem:[#allocation2 + $0xc] sm:$0x1]
    %v34 = vld [vmem:[#allocation2 + $0xe] sm:$0x1]
    %v35 = vlaneseq
    %v36 = vshrl.u32 %v35, 7
    %v37 = vsub.s32 0, %v36
    %v38 = vrot.slane %v26, %v37
    %v39 = vadd.f32 %v27, %v38
    %v40 = vadd.f32 %v28, %v38
    %v41 = vadd.f32 %v29, %v38
    %v42 = vadd.f32 %v30, %v38
    %v43 = vadd.f32 %v31, %v38
    %v44 = vadd.f32 %v32, %v38
    %v45 = vadd.f32 %v33, %v38
    %v46 = vadd.f32 %v34, %v38
    %v55 = vrot.slane %v40, 7
    %vm56 = vcmask 1041409
    %v57 = vsel %vm56, %v55, %v39
    %v58 = vrot.slane %v41, 6
    %vm59 = vcmask 1042434
    %v60 = vsel %vm59, %v58, %v57
    %v61 = vrot.slane %v42, 5
    %vm62 = vcmask 1043459
    %v63 = vsel %vm62, %v61, %v60
    %v64 = vrot.slane %v43, 4
    %vm65 = vcmask 1044484
    %v66 = vsel %vm65, %v64, %v63
    %v67 = vrot.slane %v44, 3
    %vm68 = vcmask 1045509
    %v69 = vsel %vm68, %v67, %v66
    %v70 = vrot.slane %v45, 2
    %vm71 = vcmask 1046534
    %v72 = vsel %vm71, %v70, %v69
    %v73 = vrot.slane %v46, 1
    %vm74 = vcmask 1047559
    %v75 = vsel %vm74, %v73, %v72
    %vm77 = vcmask 261120
    %78 = vst.msk [vmem:[#allocation5] sm:$0xff] %vm77, %v75
    %v79 = vld [vmem:[%s1 + $0x1] sm:$0x1]
    %v80 = vld [vmem:[#allocation2 + $0x1] sm:$0x1]
    %v81 = vld [vmem:[#allocation2 + $0x3] sm:$0x1]
    %v82 = vld [vmem:[#allocation2 + $0x5] sm:$0x1]
    %v83 = vld [vmem:[#allocation2 + $0x7] sm:$0x1]
    %v84 = vld [vmem:[#allocation2 + $0x9] sm:$0x1]
    %v85 = vld [vmem:[#allocation2 + $0xb] sm:$0x1]
    %v86 = vld [vmem:[#allocation2 + $0xd] sm:$0x1]
    %v87 = vld [vmem:[#allocation2 + $0xf] sm:$0x1]
    %v88 = vlaneseq
    %v89 = vshrl.u32 %v88, 7
    %v90 = vsub.s32 0, %v89
    %v91 = vrot.slane %v79, %v90
    %v92 = vadd.f32 %v80, %v91
    %v93 = vadd.f32 %v81, %v91
    %v94 = vadd.f32 %v82, %v91
    %v95 = vadd.f32 %v83, %v91
    %v96 = vadd.f32 %v84, %v91
    %v97 = vadd.f32 %v85, %v91
    %v98 = vadd.f32 %v86, %v91
    %v99 = vadd.f32 %v87, %v91
    %v108 = vrot.slane %v93, 7
    %v109 = vsel %vm56, %v108, %v92
    %v110 = vrot.slane %v94, 6
    %v111 = vsel %vm59, %v110, %v109
    %v112 = vrot.slane %v95, 5
    %v113 = vsel %vm62, %v112, %v111
    %v114 = vrot.slane %v96, 4
    %v115 = vsel %vm65, %v114, %v113
    %v116 = vrot.slane %v97, 3
    %v117 = vsel %vm68, %v116, %v115
    %v118 = vrot.slane %v98, 2
    %v119 = vsel %vm71, %v118, %v117
    %v120 = vrot.slane %v99, 1
    %v121 = vsel %vm74, %v120, %v119
    %s123 = scalar_lea.vmem [#allocation5], 8
    %124 = vst.msk [vmem:[%s123] sm:$0xff] %vm77, %v121
    // Predicated region
    $region14: #{positional_encoding_forward.1} parent=1 // pred_check
      _
    $region15: #{positional_encoding_forward.1} parent=1 // pred_check_branch
      %126 = sbr.rel (0) target = $region17
    $region16: #{positional_encoding_forward.1} parent=1 // pred_region
      %s128 = ssub.s32 256, 256
      %129 = vsyncadd [#allocation4], %s128
      %s130 = sshll.u32 [#allocation5], 4
      %s131 = int_to_ptr.vmem [resolvable:$true] %s130
      %136 = dma.vmem_to_hbm [thread:$0]  %s131, 256, %s2, [#allocation4], 128, 128, 8
    $region17: #{positional_encoding_forward.1} parent=1 // pred_fallthru
      _
    // Predicated region
    $region18: #{positional_encoding_forward.1} parent=1 // pred_check
      _
    $region19: #{positional_encoding_forward.1} parent=1 // pred_check_branch
      %138 = sbr.rel (0) target = $region21
    $region20: #{positional_encoding_forward.1} parent=1 // pred_region
      %139 = dma.done [#allocation4], 256
    $region21: #{positional_encoding_forward.1} parent=1 // pred_fallthru
      _
    %140 = vsyncpa [#allocation3], 1
    %141 = vsyncpa [#allocation4], 1

</llo_original>
